<compile_context>
chip_gen: v6e
topology: v6e:2x2x1
jax: 0.10.0
libtpu: 0.0.40
codegen_flags: <defaults>
</compile_context>

<pallas_src>
import jax
import jax.numpy as jnp
from jax import lax
from jax.experimental import pallas as pl
from jax.experimental.pallas import tpu as pltpu

KH = KW = 3  # fixed 3x3 kernel (matches the module default)


def _partial_conv_kernel(xcol_ref, mcol_ref, w_ref, b_ref, out_ref, nmask_ref):
    # xcol_ref, mcol_ref : (1, K, P)   im2col'd padded input / mask, K = KH*KW*Cin, P = H*W
    # w_ref              : (Cout, K)   flattened conv weight
    # b_ref              : (Cout, 1)
    # out_ref, nmask_ref : (1, Cout, P)
    Cout = w_ref.shape[0]
    P = out_ref.shape[-1]

    x_col = xcol_ref[0].astype(jnp.float32)   # (K, P)
    m_col = mcol_ref[0].astype(jnp.float32)   # (K, P)

    # Masked input, computed once (hoisted out of any per-tap loop).
    xm_col = x_col * m_col                    # (K, P)

    # All 9 taps x Cin fused into a single K=27 contraction -> lane-dense (Cout, P).
    raw = jnp.dot(w_ref[...].astype(jnp.float32), xm_col,
                  preferred_element_type=jnp.float32)           # (Cout, P)

    # Mask window sum == conv(mask, ones): one sublane reduction over the taps.
    msum = jnp.sum(m_col, axis=0, keepdims=True)                # (1, P)

    denom = jnp.maximum(msum, 1e-5)
    inv = pl.reciprocal(denom, approx=True)     # EUP slot (otherwise idle)
    inv = inv * (2.0 - denom * inv)             # one Newton step -> ~exact 1/denom

    out = (raw + b_ref[...].astype(jnp.float32)) * inv          # (Cout, P)
    new_mask = jnp.clip(msum, 0.0, 1.0)                         # (1, P)

    out_ref[...] = out[None].astype(out_ref.dtype)
    nmask_ref[...] = jnp.broadcast_to(new_mask, (Cout, P))[None].astype(nmask_ref.dtype)


def _im2col_nchw(a_nchw, padding):
    """(N, C, H, W) -> (N, KH*KW*C, H*W), row order (kh*KW + kw)*C + ci."""
    N, C, H, W = a_nchw.shape
    ap = jnp.pad(a_nchw, ((0, 0), (0, 0), (padding, padding), (padding, padding)))
    cols = []
    for kh in range(KH):
        for kw in range(KW):
            cols.append(ap[:, :, kh:kh + H, kw:kw + W].reshape(N, C, H * W))
    return jnp.stack(cols, axis=1).reshape(N, KH * KW * C, H * W)


def partial_conv2d(x_nchw, mask_nchw, weight_oihw, bias, stride=1, padding=1):
    """Partial convolution. Inputs/outputs are NCHW like the PyTorch module."""
    assert stride == 1 and padding == 1
    assert weight_oihw.shape[2:] == (KH, KW)
    N, Cin, H, W = x_nchw.shape
    Cout = weight_oihw.shape[0]
    K = KH * KW * Cin
    P = H * W

    # Layout plumbing in plain JAX: lane-dense (K, H*W) slabs per image.
    x_col = _im2col_nchw(x_nchw, padding)      # (N, K, P)
    m_col = _im2col_nchw(mask_nchw, padding)   # (N, K, P)

    # Weight rows must match the im2col row order: (co, kh, kw, ci) flattened.
    w_flat = jnp.transpose(weight_oihw, (0, 2, 3, 1)).reshape(Cout, K)
    b_col = bias.reshape(Cout, 1)

    out_flat, nmask_flat = pl.pallas_call(
        _partial_conv_kernel,
        out_shape=(jax.ShapeDtypeStruct((N, Cout, P), x_nchw.dtype),
                   jax.ShapeDtypeStruct((N, Cout, P), x_nchw.dtype)),
        grid_spec=pltpu.PrefetchScalarGridSpec(
            num_scalar_prefetch=0,
            grid=(N,),
            in_specs=[
                pl.BlockSpec((1, K, P), lambda n: (n, 0, 0)),
                pl.BlockSpec((1, K, P), lambda n: (n, 0, 0)),
                pl.BlockSpec((Cout, K), lambda n: (0, 0)),
                pl.BlockSpec((Cout, 1), lambda n: (0, 0)),
            ],
            out_specs=[
                pl.BlockSpec((1, Cout, P), lambda n: (n, 0, 0)),
                pl.BlockSpec((1, Cout, P), lambda n: (n, 0, 0)),
            ],
        ),
        compiler_params=pltpu.CompilerParams(
            dimension_semantics=("parallel",)),
    )(x_col, m_col, w_flat, b_col)

    # (N, Cout, H*W) -> (N, Cout, H, W) to match PyTorch output convention.
    return (out_flat.reshape(N, Cout, H, W),
            nmask_flat.reshape(N, Cout, H, W))


def _reference(x, mask, w, b):
    """Pure-JAX reference matching the PyTorch forward (NCHW)."""
    dn = ("NCHW", "OIHW", "NCHW")
    xm = x * mask
    out = lax.conv_general_dilated(xm, w, (1, 1), ((1, 1), (1, 1)),
                                   dimension_numbers=dn)
    out = out + b[None, :, None, None]
    ones_w = jnp.ones_like(w)
    msum = lax.conv_general_dilated(mask, ones_w, (1, 1), ((1, 1), (1, 1)),
                                    dimension_numbers=dn)
    out = out / jnp.maximum(msum, 1e-5)
    new_mask = jnp.clip(msum, 0.0, 1.0)
    return out, new_mask


if __name__ == "__main__":
    key = jax.random.PRNGKey(0)
    k_x, k_m, k_w, k_b = jax.random.split(key, 4)

    N, Cin, Cout, H, W = 2, 3, 3, 16, 16  # module defaults: in=out=3, k=3, s=1, p=1

    x = jax.random.normal(k_x, (N, Cin, H, W), dtype=jnp.float32)
    mask = (jax.random.uniform(k_m, (N, Cin, H, W)) > 0.4).astype(jnp.float32)

    # Deterministic synthetic parameters (shapes from nn.Conv2d(Cin, Cout, 3)).
    weight = 0.1 * jax.random.normal(k_w, (Cout, Cin, KH, KW), dtype=jnp.float32)
    bias = 0.1 * jax.random.normal(k_b, (Cout,), dtype=jnp.float32)

    out, new_mask = partial_conv2d(x, mask, weight, bias)
    out, new_mask = jax.block_until_ready((out, new_mask))

    out_ref, nm_ref = _reference(x, mask, weight, bias)
    assert out.shape == (N, Cout, H, W) and new_mask.shape == (N, Cout, H, W)
    assert jnp.allclose(out, out_ref, atol=1e-4, rtol=1e-4), "output mismatch"
    assert jnp.allclose(new_mask, nm_ref, atol=1e-5, rtol=1e-5), "mask mismatch"

    print("KERNEL_OK")
</pallas_src>

<mosaic_0001>
module attributes {stable_mosaic.version = 11 : i64} {
  func.func @_partial_conv_kernel(%arg0: i32, %arg1: memref<1x27x256xf32, #tpu.memory_space<vmem>>, %arg2: memref<1x27x256xf32, #tpu.memory_space<vmem>>, %arg3: memref<3x27xf32, #tpu.memory_space<vmem>>, %arg4: memref<3x1xf32, #tpu.memory_space<vmem>>, %arg5: memref<1x3x256xf32, #tpu.memory_space<vmem>>, %arg6: memref<1x3x256xf32, #tpu.memory_space<vmem>>) attributes {dimension_semantics = [#tpu.dimension_semantics<parallel>], iteration_bounds = array<i64: 2>, scalar_prefetch = 0 : i64, scratch_operands = 0 : i64, tpu.core_type = #tpu.core_type<tc>, window_params = [{transform_indices = @transform_0, window_bounds = array<i64: 1, 27, 256>}, {transform_indices = @transform_1, window_bounds = array<i64: 1, 27, 256>}, {pipeline_mode = #tpu.pipeline_mode<synchronous>, transform_indices = @transform_2, window_bounds = array<i64: 3, 27>}, {pipeline_mode = #tpu.pipeline_mode<synchronous>, transform_indices = @transform_3, window_bounds = array<i64: 3, 1>}, {transform_indices = @transform_4, window_bounds = array<i64: 1, 3, 256>}, {transform_indices = @transform_5, window_bounds = array<i64: 1, 3, 256>}]} {
    %c0 = arith.constant 0 : index
    %c0_0 = arith.constant 0 : index
    %c0_1 = arith.constant 0 : index
    %0 = vector.load %arg1[%c0, %c0_0, %c0_1] : memref<1x27x256xf32, #tpu.memory_space<vmem>>, vector<1x27x256xf32>
    %1 = vector.shape_cast %0 : vector<1x27x256xf32> to vector<27x256xf32>
    %c0_2 = arith.constant 0 : index
    %c0_3 = arith.constant 0 : index
    %c0_4 = arith.constant 0 : index
    %2 = vector.load %arg2[%c0_2, %c0_3, %c0_4] : memref<1x27x256xf32, #tpu.memory_space<vmem>>, vector<1x27x256xf32>
    %3 = vector.shape_cast %2 : vector<1x27x256xf32> to vector<27x256xf32>
    %4 = arith.mulf %1, %3 : vector<27x256xf32>
    %c0_5 = arith.constant 0 : index
    %c0_6 = arith.constant 0 : index
    %5 = vector.load %arg3[%c0_5, %c0_6] : memref<3x27xf32, #tpu.memory_space<vmem>>, vector<3x27xf32>
    %cst = arith.constant dense<0.000000e+00> : vector<3x256xf32>
    %6 = tpu.matmul %5, %4, %cst {dimension_numbers = #tpu.dot_dimension_numbers<[1], [0], [0], [1], [0, 0, 1, 1], [], []>} : vector<3x27xf32>, vector<27x256xf32>, vector<3x256xf32> -> vector<3x256xf32>
    %cst_7 = arith.constant dense<0.000000e+00> : vector<256xf32>
    %7 = vector.multi_reduction <add>, %3, %cst_7 [0] : vector<27x256xf32> to vector<256xf32>
    %8 = vector.shape_cast %7 : vector<256xf32> to vector<1x256xf32>
    %cst_8 = arith.constant 9.99999974E-6 : f32
    %9 = vector.broadcast %cst_8 : f32 to vector<1x256xf32>
    %10 = arith.maximumf %8, %9 : vector<1x256xf32>
    %11 = tpu.reciprocal %10 {approx = true} : vector<1x256xf32> -> vector<1x256xf32>
    %12 = arith.mulf %10, %11 : vector<1x256xf32>
    %cst_9 = arith.constant 2.000000e+00 : f32
    %13 = vector.broadcast %cst_9 : f32 to vector<1x256xf32>
    %14 = arith.subf %13, %12 : vector<1x256xf32>
    %15 = arith.mulf %11, %14 : vector<1x256xf32>
    %c0_10 = arith.constant 0 : index
    %c0_11 = arith.constant 0 : index
    %16 = vector.load %arg4[%c0_10, %c0_11] : memref<3x1xf32, #tpu.memory_space<vmem>>, vector<3x1xf32>
    %17 = vector.broadcast %16 : vector<3x1xf32> to vector<3x256xf32>
    %18 = arith.addf %6, %17 : vector<3x256xf32>
    %19 = vector.broadcast %15 : vector<1x256xf32> to vector<3x256xf32>
    %20 = arith.mulf %18, %19 : vector<3x256xf32>
    %cst_12 = arith.constant 0.000000e+00 : f32
    %cst_13 = arith.constant 1.000000e+00 : f32
    %21 = vector.broadcast %cst_12 : f32 to vector<1x256xf32>
    %22 = arith.maximumf %21, %8 : vector<1x256xf32>
    %23 = vector.broadcast %cst_13 : f32 to vector<1x256xf32>
    %24 = arith.minimumf %23, %22 : vector<1x256xf32>
    %25 = vector.shape_cast %20 : vector<3x256xf32> to vector<1x3x256xf32>
    %c0_14 = arith.constant 0 : index
    %c0_15 = arith.constant 0 : index
    %c0_16 = arith.constant 0 : index
    %26 = vector.load %arg5[%c0_14, %c0_15, %c0_16] : memref<1x3x256xf32, #tpu.memory_space<vmem>>, vector<1x3x256xf32>
    tpu.vector_store %arg5[%c0_14, %c0_15, %c0_16], %25 {strides = array<i32>} : memref<1x3x256xf32, #tpu.memory_space<vmem>>, vector<1x3x256xf32>,
    %27 = vector.shape_cast %24 : vector<1x256xf32> to vector<1x256xf32>
    %28 = vector.broadcast %27 : vector<1x256xf32> to vector<3x256xf32>
    %29 = vector.shape_cast %28 : vector<3x256xf32> to vector<1x3x256xf32>
    %c0_17 = arith.constant 0 : index
    %c0_18 = arith.constant 0 : index
    %c0_19 = arith.constant 0 : index
    %30 = vector.load %arg6[%c0_17, %c0_18, %c0_19] : memref<1x3x256xf32, #tpu.memory_space<vmem>>, vector<1x3x256xf32>
    tpu.vector_store %arg6[%c0_17, %c0_18, %c0_19], %29 {strides = array<i32>} : memref<1x3x256xf32, #tpu.memory_space<vmem>>, vector<1x3x256xf32>,
    return
  }
  func.func @transform_0(%arg0: i32) -> (i32, i32, i32) {
    %c0_i32 = arith.constant 0 : i32
    %c0_i32_0 = arith.constant 0 : i32
    %c0_i32_1 = arith.constant 0 : i32
    return %arg0, %c0_i32, %c0_i32_0 : i32, i32, i32
  }
  func.func @transform_1(%arg0: i32) -> (i32, i32, i32) {
    %c0_i32 = arith.constant 0 : i32
    %c0_i32_0 = arith.constant 0 : i32
    %c0_i32_1 = arith.constant 0 : i32
    return %arg0, %c0_i32, %c0_i32_0 : i32, i32, i32
  }
  func.func @transform_2(%arg0: i32) -> (i32, i32) {
    %c0_i32 = arith.constant 0 : i32
    %c0_i32_0 = arith.constant 0 : i32
    %c0_i32_1 = arith.constant 0 : i32
    return %c0_i32, %c0_i32_0 : i32, i32
  }
  func.func @transform_3(%arg0: i32) -> (i32, i32) {
    %c0_i32 = arith.constant 0 : i32
    %c0_i32_0 = arith.constant 0 : i32
    %c0_i32_1 = arith.constant 0 : i32
    return %c0_i32, %c0_i32_0 : i32, i32
  }
  func.func @transform_4(%arg0: i32) -> (i32, i32, i32) {
    %c0_i32 = arith.constant 0 : i32
    %c0_i32_0 = arith.constant 0 : i32
    %c0_i32_1 = arith.constant 0 : i32
    return %arg0, %c0_i32, %c0_i32_0 : i32, i32, i32
  }
  func.func @transform_5(%arg0: i32) -> (i32, i32, i32) {
    %c0_i32 = arith.constant 0 : i32
    %c0_i32_0 = arith.constant 0 : i32
    %c0_i32_1 = arith.constant 0 : i32
    return %arg0, %c0_i32, %c0_i32_0 : i32, i32, i32
  }
}

</mosaic_0001>

<llo_original>
// kernel: tpu_custom_call.1
$region0: #{tpu_custom_call.1}
  #allocation0 [shape = 'u32[]', space=smem, size = 0x4, offset = 0x4, fixed_abs, tag = 'smem constant byte address 0x4 - core index']
  #allocation1 [shape = 'u32[144,128]{1,0:T(1,128)}', space=vmem, size = 0x12000, scoped, tag = 'internal scratch']
  %s0 = inlined_call_operand.vmem [shape: f32[2,27,256], index: 0, kind: input, shape index: {}]
  %s1 = inlined_call_operand.vmem [shape: f32[2,27,256], index: 1, kind: input, shape index: {}]
  %s2 = inlined_call_operand.vmem [shape: f32[3,27], index: 2, kind: input, shape index: {}]
  %s3 = inlined_call_operand.vmem [shape: f32[3,1], index: 3, kind: input, shape index: {}]
  %s4 = inlined_call_operand.vmem [shape: f32[2,3,256], index: 4, kind: output, shape index: {0}]
  %s5 = inlined_call_operand.vmem [shape: f32[2,3,256], index: 5, kind: output, shape index: {1}]
  %6 = xla_tuple %s4, %s5
  %s7 = sld [smem:[#allocation0]]
  $region57: #{tpu_custom_call.1} parent=0
    _
  %s9 = ssub.s32 1, %s7
  %s10 = scalar_select 0, %s9, %s7
  loop: start=0, step=1, limit=4
  $region2: #{tpu_custom_call.1} parent=0 // loop_pre_header
    _
  $region3: #{tpu_custom_call.1} parent=0 // loop_header
    %s12 = sphi 0, %s16
    %p13 = scmp.ge.s32.totalorder %s12, 4
    %s22 = sphi 0, %s24
    %s25 = sphi 0, %s22
    %s26 = sphi 0, %s25
    %s42 = sphi 0, %s26
    %s48 = sphi 0, %s50
    %s51 = sphi 0, %s48
    %s52 = sphi 0, %s51
    %s68 = sphi 0, %s52
    %s72 = sphi 0, %s72
    %s74 = sphi 0, %s72
    %s75 = sphi 0, %s74
    %s89 = sphi 0, %s75
    %s93 = sphi 0, %s93
    %s95 = sphi 0, %s93
    %s96 = sphi 0, %s95
    %s110 = sphi 0, %s96
    %s116 = sphi 0, %s118
    %s119 = sphi 0, %s116
    %s120 = sphi 0, %s119
    %s136 = sphi 0, %s120
    %s142 = sphi 0, %s144
    %s145 = sphi 0, %s142
    %s146 = sphi 0, %s145
    %s162 = sphi 0, %s146
  $region4: #{tpu_custom_call.1} parent=0 // loop_header_branch
    %15 = sbr.rel (%p13) target = $region8
  $region5: #{tpu_custom_call.1} parent=0 // loop_body
    %s17 = ssub.s32 %s12, 1
    %s18 = ssub.s32 %s12, 2
    %s19 = sadd.s32 %s12, 1
    %s20 = ssub.s32 %s12, %s19
    %p21 = scmp.eq.s32.totalorder %s20, 0
    %s23 = sadd.s32 %s22, 1
    %s24 = scalar_select %p21, %s22, %s23
    %p27 = pneg %p21
    %p28 = scmp.eq.s32.totalorder %s12, 1
    %p29 = por %p27, %p28
    %p30 = scmp.ne.s32.totalorder %s22, %s25
    %p31 = scmp.eq.s32.totalorder %s12, 0
    %p32 = por %p30, %p31
    %p33 = scmp.ne.s32.totalorder %s22, %s25
    %p34 = scmp.eq.s32.totalorder %s17, 1
    %p35 = por %p33, %p34
    %p36 = scmp.ne.s32.totalorder %s25, %s26
    %p37 = scmp.eq.s32.totalorder %s17, 0
    %p38 = por %p36, %p37
    %p39 = scmp.ne.s32.totalorder %s25, %s26
    %p40 = scmp.eq.s32.totalorder %s18, 1
    %p41 = por %p39, %p40
    %p43 = scmp.ne.s32.totalorder %s26, %s42
    %p44 = scmp.eq.s32.totalorder %s18, 0
    %p45 = por %p43, %p44
    %s46 = ssub.s32 %s12, %s19
    %p47 = scmp.eq.s32.totalorder %s46, 0
    %s49 = sadd.s32 %s48, 1
    %s50 = scalar_select %p47, %s48, %s49
    %p53 = pneg %p47
    %p54 = scmp.eq.s32.totalorder %s12, 1
    %p55 = por %p53, %p54
    %p56 = scmp.ne.s32.totalorder %s48, %s51
    %p57 = scmp.eq.s32.totalorder %s12, 0
    %p58 = por %p56, %p57
    %p59 = scmp.ne.s32.totalorder %s48, %s51
    %p60 = scmp.eq.s32.totalorder %s17, 1
    %p61 = por %p59, %p60
    %p62 = scmp.ne.s32.totalorder %s51, %s52
    %p63 = scmp.eq.s32.totalorder %s17, 0
    %p64 = por %p62, %p63
    %p65 = scmp.ne.s32.totalorder %s51, %s52
    %p66 = scmp.eq.s32.totalorder %s18, 1
    %p67 = por %p65, %p66
    %p69 = scmp.ne.s32.totalorder %s52, %s68
    %p70 = scmp.eq.s32.totalorder %s18, 0
    %p71 = por %p69, %p70
    %s73 = sadd.s32 %s72, 1
    %p76 = scmp.eq.s32.totalorder %s12, 1
    %p77 = scmp.ne.s32.totalorder %s72, %s74
    %p78 = scmp.eq.s32.totalorder %s12, 0
    %p79 = por %p77, %p78
    %p80 = scmp.ne.s32.totalorder %s72, %s74
    %p81 = scmp.eq.s32.totalorder %s17, 1
    %p82 = por %p80, %p81
    %p83 = scmp.ne.s32.totalorder %s74, %s75
    %p84 = scmp.eq.s32.totalorder %s17, 0
    %p85 = por %p83, %p84
    %p86 = scmp.ne.s32.totalorder %s74, %s75
    %p87 = scmp.eq.s32.totalorder %s18, 1
    %p88 = por %p86, %p87
    %p90 = scmp.ne.s32.totalorder %s75, %s89
    %p91 = scmp.eq.s32.totalorder %s18, 0
    %p92 = por %p90, %p91
    %s94 = sadd.s32 %s93, 1
    %p97 = scmp.eq.s32.totalorder %s12, 1
    %p98 = scmp.ne.s32.totalorder %s93, %s95
    %p99 = scmp.eq.s32.totalorder %s12, 0
    %p100 = por %p98, %p99
    %p101 = scmp.ne.s32.totalorder %s93, %s95
    %p102 = scmp.eq.s32.totalorder %s17, 1
    %p103 = por %p101, %p102
    %p104 = scmp.ne.s32.totalorder %s95, %s96
    %p105 = scmp.eq.s32.totalorder %s17, 0
    %p106 = por %p104, %p105
    %p107 = scmp.ne.s32.totalorder %s95, %s96
    %p108 = scmp.eq.s32.totalorder %s18, 1
    %p109 = por %p107, %p108
    %p111 = scmp.ne.s32.totalorder %s96, %s110
    %p112 = scmp.eq.s32.totalorder %s18, 0
    %p113 = por %p111, %p112
    %s114 = ssub.s32 %s12, %s19
    %p115 = scmp.eq.s32.totalorder %s114, 0
    %s117 = sadd.s32 %s116, 1
    %s118 = scalar_select %p115, %s116, %s117
    %p121 = pneg %p115
    %p122 = scmp.eq.s32.totalorder %s12, 1
    %p123 = por %p121, %p122
    %p124 = scmp.ne.s32.totalorder %s116, %s119
    %p125 = scmp.eq.s32.totalorder %s12, 0
    %p126 = por %p124, %p125
    %p127 = scmp.ne.s32.totalorder %s116, %s119
    %p128 = scmp.eq.s32.totalorder %s17, 1
    %p129 = por %p127, %p128
    %p130 = scmp.ne.s32.totalorder %s119, %s120
    %p131 = scmp.eq.s32.totalorder %s17, 0
    %p132 = por %p130, %p131
    %p133 = scmp.ne.s32.totalorder %s119, %s120
    %p134 = scmp.eq.s32.totalorder %s18, 1
    %p135 = por %p133, %p134
    %p137 = scmp.ne.s32.totalorder %s120, %s136
    %p138 = scmp.eq.s32.totalorder %s18, 0
    %p139 = por %p137, %p138
    %s140 = ssub.s32 %s12, %s19
    %p141 = scmp.eq.s32.totalorder %s140, 0
    %s143 = sadd.s32 %s142, 1
    %s144 = scalar_select %p141, %s142, %s143
    %p147 = pneg %p141
    %p148 = scmp.eq.s32.totalorder %s12, 1
    %p149 = por %p147, %p148
    %p150 = scmp.ne.s32.totalorder %s142, %s145
    %p151 = scmp.eq.s32.totalorder %s12, 0
    %p152 = por %p150, %p151
    %p153 = scmp.ne.s32.totalorder %s142, %s145
    %p154 = scmp.eq.s32.totalorder %s17, 1
    %p155 = por %p153, %p154
    %p156 = scmp.ne.s32.totalorder %s145, %s146
    %p157 = scmp.eq.s32.totalorder %s17, 0
    %p158 = por %p156, %p157
    %p159 = scmp.ne.s32.totalorder %s145, %s146
    %p160 = scmp.eq.s32.totalorder %s18, 1
    %p161 = por %p159, %p160
    %p163 = scmp.ne.s32.totalorder %s146, %s162
    %p164 = scmp.eq.s32.totalorder %s18, 0
    %p165 = por %p163, %p164
    %p166 = scmp.le.s32.totalorder 1, %s12
    %p167 = scmp.lt.s32.totalorder %s12, 3
    %p168 = pnand %p166, %p167
    %p169 = pneg %p168
    // Predicated region
    $region9: #{tpu_custom_call.1} parent=5 // pred_check
      _
    $region10: #{tpu_custom_call.1} parent=5 // pred_check_branch
      %171 = sbr.rel (%p168) target = $region12
    $region11: #{tpu_custom_call.1} parent=5 // pred_region
      %s172 = ssub.s32 %s12, 1
      // Predicated region
      $region13: #{tpu_custom_call.1} parent=11 // pred_check
        %p173 = pneg %p85
      $region14: #{tpu_custom_call.1} parent=11 // pred_check_branch
        %175 = sbr.rel (%p173) target = $region16
      $region15: #{tpu_custom_call.1} parent=11 // pred_region
        _
      $region16: #{tpu_custom_call.1} parent=11 // pred_fallthru
        _
      // Predicated region
      $region17: #{tpu_custom_call.1} parent=11 // pred_check
        %p176 = pneg %p106
      $region18: #{tpu_custom_call.1} parent=11 // pred_check_branch
        %178 = sbr.rel (%p176) target = $region20
      $region19: #{tpu_custom_call.1} parent=11 // pred_region
        _
      $region20: #{tpu_custom_call.1} parent=11 // pred_fallthru
        _
    $region12: #{tpu_custom_call.1} parent=5 // pred_fallthru
      _
    %p179 = scmp.lt.s32.totalorder %s12, 2
    // Predicated region
    $region21: #{tpu_custom_call.1} parent=5 // pred_check
      %p180 = pneg %p179
    $region22: #{tpu_custom_call.1} parent=5 // pred_check_branch
      %182 = sbr.rel (%p180) target = $region24
    $region23: #{tpu_custom_call.1} parent=5 // pred_region
      // Predicated region
      $region25: #{tpu_custom_call.1} parent=23 // pred_check
        %p183 = pneg %p32
      $region26: #{tpu_custom_call.1} parent=23 // pred_check_branch
        %185 = sbr.rel (%p183) target = $region28
      $region27: #{tpu_custom_call.1} parent=23 // pred_region
        %p186 = scmp.lt.s32.totalorder %s12, 1
        %s187 = scalar_select %p186, %s12, 1
        %s188 = smul.addr %s187, 8
        %s189 = smul.addr %s188, 8
        %s190 = scalar_lea.vmem %s0, %s189
      $region28: #{tpu_custom_call.1} parent=23 // pred_fallthru
        _
      // Predicated region
      $region29: #{tpu_custom_call.1} parent=23 // pred_check
        %p191 = pneg %p58
      $region30: #{tpu_custom_call.1} parent=23 // pred_check_branch
        %193 = sbr.rel (%p191) target = $region32
      $region31: #{tpu_custom_call.1} parent=23 // pred_region
        %p194 = scmp.lt.s32.totalorder %s12, 1
        %s195 = scalar_select %p194, %s12, 1
        %s196 = smul.addr %s195, 8
        %s197 = smul.addr %s196, 8
        %s198 = scalar_lea.vmem %s1, %s197
      $region32: #{tpu_custom_call.1} parent=23 // pred_fallthru
        _
    $region24: #{tpu_custom_call.1} parent=5 // pred_fallthru
      _
    %p199 = scmp.le.s32.totalorder 1, %s12
    %p200 = scmp.lt.s32.totalorder %s12, 3
    %p201 = pnand %p199, %p200
    %p202 = pneg %p201
    // Predicated region
    $region33: #{tpu_custom_call.1} parent=5 // pred_check
      _
    $region34: #{tpu_custom_call.1} parent=5 // pred_check_branch
      %204 = sbr.rel (%p201) target = $region36
    $region35: #{tpu_custom_call.1} parent=5 // pred_region
      %s205 = ssub.s32 %s12, 1
      %p206 = scmp.lt.s32.totalorder %s17, 1
      %s207 = scalar_select %p206, %s17, 1
      %s208 = smul.addr %s207, 8
      %s209 = smul.addr %s208, 8
      %s210 = scalar_lea.vmem %s0, %s209
      %p211 = pneg %p38
      %p212 = pneg %p35
      %p213 = scmp.lt.s32.totalorder %s17, 1
      %s214 = scalar_select %p213, %s17, 1
      %s215 = smul.addr %s214, 8
      %s216 = smul.addr %s215, 8
      %s217 = scalar_lea.vmem %s1, %s216
      %p218 = pneg %p64
      %p219 = pneg %p61
      %p220 = pneg %p85
      %p221 = pneg %p82
      %p222 = pneg %p106
      %p223 = pneg %p103
      %p224 = pneg %p132
      %p225 = pneg %p129
      %p226 = scmp.lt.s32.totalorder %s17, 1
      %s227 = scalar_select %p226, %s17, 1
      %s228 = smul.addr %s227, 2
      %s229 = smul.addr %s228, 4
      %s230 = scalar_lea.vmem %s4, %s229
      %p231 = pneg %p158
      %p232 = pneg %p155
      %p233 = scmp.lt.s32.totalorder %s17, 1
      %s234 = scalar_select %p233, %s17, 1
      %s235 = smul.addr %s234, 2
      %s236 = smul.addr %s235, 4
      %s237 = scalar_lea.vmem %s5, %s236
      %p238 = scmp.lt.s32.totalorder %s17, 1
      %s239 = scalar_select %p238, %s17, 1
      %s240 = smul.addr %s239, 8
      %s241 = smul.addr %s240, 8
      %s242 = scalar_lea.vmem %s0, %s241
      %p243 = scmp.lt.s32.totalorder %s17, 1
      %s244 = scalar_select %p243, %s17, 1
      %s245 = smul.addr %s244, 8
      %s246 = smul.addr %s245, 8
      %s247 = scalar_lea.vmem %s1, %s246
      %p248 = scmp.lt.s32.totalorder %s17, 1
      %s249 = scalar_select %p248, %s17, 1
      %s250 = smul.addr %s249, 2
      %s251 = smul.addr %s250, 4
      %s252 = scalar_lea.vmem %s4, %s251
      %p253 = scmp.lt.s32.totalorder %s17, 1
      %s254 = scalar_select %p253, %s17, 1
      %s255 = smul.addr %s254, 2
      %s256 = smul.addr %s255, 4
      %s257 = scalar_lea.vmem %s5, %s256
      %v258 = vld [vmem:[%s242] sm:$0xff]
      %v259 = vld [vmem:[%s242 + $0x8] sm:$0xff]
      %v260 = vld [vmem:[%s242 + $0x10] sm:$0xff]
      %v261 = vld [vmem:[%s242 + $0x18] sm:$0xff]
      %v262 = vld [vmem:[%s242 + $0x20] sm:$0xff]
      %v263 = vld [vmem:[%s242 + $0x28] sm:$0xff]
      %v264 = vld [vmem:[%s242 + $0x30] sm:$0x7]
      %v265 = vld [vmem:[%s242 + $0x38] sm:$0x7]
      %v266 = vld [vmem:[%s247] sm:$0xff]
      %v267 = vld [vmem:[%s247 + $0x8] sm:$0xff]
      %v268 = vld [vmem:[%s247 + $0x10] sm:$0xff]
      %v269 = vld [vmem:[%s247 + $0x18] sm:$0xff]
      %v270 = vld [vmem:[%s247 + $0x20] sm:$0xff]
      %v271 = vld [vmem:[%s247 + $0x28] sm:$0xff]
      %v272 = vld [vmem:[%s247 + $0x30] sm:$0x7]
      %v273 = vld [vmem:[%s247 + $0x38] sm:$0x7]
      %v274 = vmul.f32 %v258, %v266
      %v275 = vmul.f32 %v259, %v267
      %v276 = vmul.f32 %v260, %v268
      %v277 = vmul.f32 %v261, %v269
      %v278 = vmul.f32 %v262, %v270
      %v279 = vmul.f32 %v263, %v271
      %v280 = vmul.f32 %v264, %v272
      %v281 = vmul.f32 %v265, %v273
      %v282 = vld [vmem:[%s2] sm:$0x7]
      %v283 = vadd.f32 %v266, %v268
      %v284 = vadd.f32 %v283, %v270
      %vm285 = vcmask 1042432
      %v286 = vsel %vm285, %v272, 0.0
      %v287 = vadd.f32 %v284, %v286
      %v288 = vrot.slane %v287, 4
      %v289 = vadd.f32 %v287, %v288
      %v290 = vrot.slane %v289, 2
      %v291 = vadd.f32 %v289, %v290
      %v292 = vrot.slane %v291, 1
      %v293 = vadd.f32 %v291, %v292
      %v294 = vadd.f32 %v267, %v269
      %v295 = vadd.f32 %v294, %v271
      %v296 = vsel %vm285, %v273, 0.0
      %v297 = vadd.f32 %v295, %v296
      %v298 = vrot.slane %v297, 4
      %v299 = vadd.f32 %v297, %v298
      %v300 = vrot.slane %v299, 2
      %v301 = vadd.f32 %v299, %v300
      %v302 = vrot.slane %v301, 1
      %v303 = vadd.f32 %v301, %v302
      %v304 = vmax.f32 %v293, 1e-05
      %v305 = vmax.f32 %v303, 1e-05
      %v306 = vrcp.pop %v304
      %v307 = vrcp.pop %v305
      %v308 = vmul.f32 %v304, %v306
      %v309 = vmul.f32 %v305, %v307
      %v310 = vsub.f32 2.0, %v308
      %v311 = vsub.f32 2.0, %v309
      %v312 = vmul.f32 %v306, %v310
      %v313 = vmul.f32 %v307, %v311
      %v314 = vld [vmem:[%s3] sm:$0x7]
      %316 = vset.pattern.permute.xlu0 0
      %317 = vperm.xlu0 %316, %v314
      %v318 = vpop.permute.xlu0 %317
      %vm320 = vcmask 220160
      %v322 = vsel %vm320, %v282, 0
      %v325 = vsel %vm285, %v280, 0
      %v328 = vsel %vm285, %v281, 0
      %330 = vmatprep.subr.mxu0 0.0
      %331 = vmatpush1.msra.mxu0 0.0
      %332 = vmatprep.subr.mxu0 0.0
      %333 = vmatpush1.msra.mxu0 0.0
      %334 = vmatprep.subr.mxu0 0.0
      %335 = vmatpush1.msra.mxu0 0.0
      %336 = vmatprep.subr.mxu0 0.0
      %337 = vmatpush1.msra.mxu0 0.0
      %338 = vmatprep.subr.mxu0 0.0
      %339 = vmatpush1.msra.mxu0 0.0
      %340 = vmatprep.subr.mxu0 0.0
      %341 = vmatpush1.msra.mxu0 0.0
      %342 = vmatprep.subr.mxu0 0.0
      %343 = vmatpush1.msra.mxu0 0.0
      %344 = vmatprep.subr.mxu0 0.0
      %345 = vmatpush1.msra.mxu0 0.0
      %346 = vmatprep.subr.mxu0 0.0
      %347 = vmatpush1.msra.mxu0 0.0
      %348 = vmatprep.subr.mxu0 0.0
      %349 = vmatpush1.msra.mxu0 0.0
      %350 = vmatprep.subr.mxu0 0.0
      %351 = vmatpush1.msra.mxu0 0.0
      %352 = vmatprep.subr.mxu0 0.0
      %353 = vmatpush1.msra.mxu0 0.0
      %354 = vmatprep.subr.mxu0 %v328
      %355 = vmatpush1.msra.mxu0 %v325
      %356 = vmatprep.subr.mxu0 %v279
      %357 = vmatpush1.msra.mxu0 %v278
      %358 = vmatprep.subr.mxu0 %v277
      %359 = vmatpush1.msra.mxu0 %v276
      %360 = vmatprep.subr.mxu0 %v275
      %361 = vmatpush1.msra.mxu0 %v274
      %362 = vmatprep.subr.mxu0 0.0
      %363 = vmatpush2.msra.mxu0 0.0
      %364 = vmatprep.subr.mxu0 0.0
      %365 = vmatpush2.msra.mxu0 0.0
      %366 = vmatprep.subr.mxu0 0.0
      %367 = vmatpush2.msra.mxu0 0.0
      %368 = vmatprep.subr.mxu0 0.0
      %369 = vmatpush2.msra.mxu0 0.0
      %370 = vmatprep.subr.mxu0 0.0
      %371 = vmatpush2.msra.mxu0 0.0
      %372 = vmatprep.subr.mxu0 0.0
      %373 = vmatpush2.msra.mxu0 0.0
      %374 = vmatprep.subr.mxu0 0.0
      %375 = vmatpush2.msra.mxu0 0.0
      %376 = vmatprep.subr.mxu0 0.0
      %377 = vmatpush2.msra.mxu0 0.0
      %378 = vmatprep.subr.mxu0 0.0
      %379 = vmatpush2.msra.mxu0 0.0
      %380 = vmatprep.subr.mxu0 0.0
      %381 = vmatpush2.msra.mxu0 0.0
      %382 = vmatprep.subr.mxu0 0.0
      %383 = vmatpush2.msra.mxu0 0.0
      %384 = vmatprep.subr.mxu0 0.0
      %385 = vmatpush2.msra.mxu0 0.0
      %386 = vmatprep.subr.mxu0 0.0
      %387 = vmatpush2.msra.mxu0 0.0
      %388 = vmatprep.subr.mxu0 0.0
      %389 = vmatpush2.msra.mxu0 0.0
      %390 = vmatprep.subr.mxu0 0.0
      %391 = vmatpush2.msra.mxu0 0.0
      %392 = vmatprep.subr.mxu0 0.0
      %393 = vmatpush2.msra.mxu0 0.0
      %394 = vmatprep.mubr.f32.mxu0 0.0
      %395 = vmatmul.mubr.f32.gmra.mxu0 %v322
      %v396 = vpop.f32.mrf.mxu0
      %v397 = vadd.f32 %v318, %v396
      %v398 = vpop.f32.mrf.mxu0
      %v399 = vadd.f32 %v318, %v398
      %400 = vdwg.mxu0
      %v401 = vmul.f32 %v397, %v312
      %v402 = vmul.f32 %v399, %v313
      %v403 = vmax.f32 %v293, 0.0
      %v404 = vmax.f32 %v303, 0.0
      %v405 = vmin.f32 %v403, 1.0
      %v406 = vmin.f32 %v404, 1.0
      %v409 = vcombine.low %v401, %v402
      %411 = vst [vmem:[%s252] sm:$0x77] %v409
      %v414 = vcombine.low %v405, %v406
      %416 = vst [vmem:[%s257] sm:$0x77] %v414
      %p417 = scmp.lt.s32.totalorder %s17, 1
      %s418 = scalar_select %p417, %s17, 1
      %s419 = smul.addr %s418, 2
      %s420 = smul.addr %s419, 4
      %s421 = scalar_lea.vmem %s4, %s420
      %p422 = scmp.lt.s32.totalorder %s17, 1
      %s423 = scalar_select %p422, %s17, 1
      %s424 = smul.addr %s423, 2
      %s425 = smul.addr %s424, 4
      %s426 = scalar_lea.vmem %s5, %s425
      // Predicated region
      $region37: #{tpu_custom_call.1} parent=35 // pred_check
        %p427 = pneg %p129
      $region38: #{tpu_custom_call.1} parent=35 // pred_check_branch
        %429 = sbr.rel (%p427) target = $region40
      $region39: #{tpu_custom_call.1} parent=35 // pred_region
        _
      $region40: #{tpu_custom_call.1} parent=35 // pred_fallthru
        _
      // Predicated region
      $region41: #{tpu_custom_call.1} parent=35 // pred_check
        %p430 = pneg %p155
      $region42: #{tpu_custom_call.1} parent=35 // pred_check_branch
        %432 = sbr.rel (%p430) target = $region44
      $region43: #{tpu_custom_call.1} parent=35 // pred_region
        _
      $region44: #{tpu_custom_call.1} parent=35 // pred_fallthru
        _
    $region36: #{tpu_custom_call.1} parent=5 // pred_fallthru
      _
    %p433 = scmp.le.s32.totalorder 2, %s12
    // Predicated region
    $region45: #{tpu_custom_call.1} parent=5 // pred_check
      %p434 = pneg %p433
    $region46: #{tpu_custom_call.1} parent=5 // pred_check_branch
      %436 = sbr.rel (%p434) target = $region48
    $region47: #{tpu_custom_call.1} parent=5 // pred_region
      %s437 = ssub.s32 %s12, 2
      // Predicated region
      $region49: #{tpu_custom_call.1} parent=47 // pred_check
        %p438 = pneg %p135
      $region50: #{tpu_custom_call.1} parent=47 // pred_check_branch
        %440 = sbr.rel (%p438) target = $region52
      $region51: #{tpu_custom_call.1} parent=47 // pred_region
        %p441 = scmp.lt.s32.totalorder %s18, 1
        %s442 = scalar_select %p441, %s18, 1
        %s443 = smul.addr %s442, 2
        %s444 = smul.addr %s443, 4
        %s445 = scalar_lea.vmem %s4, %s444
      $region52: #{tpu_custom_call.1} parent=47 // pred_fallthru
        _
      // Predicated region
      $region53: #{tpu_custom_call.1} parent=47 // pred_check
        %p446 = pneg %p161
      $region54: #{tpu_custom_call.1} parent=47 // pred_check_branch
        %448 = sbr.rel (%p446) target = $region56
      $region55: #{tpu_custom_call.1} parent=47 // pred_region
        %p449 = scmp.lt.s32.totalorder %s18, 1
        %s450 = scalar_select %p449, %s18, 1
        %s451 = smul.addr %s450, 2
        %s452 = smul.addr %s451, 4
        %s453 = scalar_lea.vmem %s5, %s452
      $region56: #{tpu_custom_call.1} parent=47 // pred_fallthru
        _
    $region48: #{tpu_custom_call.1} parent=5 // pred_fallthru
      _
  $region6: #{tpu_custom_call.1} parent=0 // loop_footer
    %s16 = sadd.s32 1, %s12
  $region7: #{tpu_custom_call.1} parent=0 // loop_footer_branch
    %11 = sbr.rel target = $region3
  $region8: #{tpu_custom_call.1} parent=0 // loop_exit
    _

</llo_original>
